<compile_context>
chip_gen: v7x
topology: tpu7x:2x2x1
jax: 0.10.0
libtpu: 0.0.40
codegen_flags: <defaults>
</compile_context>

<pallas_src>
import functools

import jax
import jax.numpy as jnp
from jax.experimental import pallas as pl
from jax.experimental.pallas import tpu as pltpu

BN_EPS = 1e-5
_W_ROW_ALIGN = 16     # bf16 sublane tile
_VEC_ROW_STRIDE = 8   # f32 sublane tile

_VMEM_SPEC = pl.BlockSpec(memory_space=pltpu.MemorySpace.VMEM)


def _round_up(x, m):
    return ((x + m - 1) // m) * m


# ---------------------------------------------------------------------------
# Static packing layout (all offsets known at trace time).
# ---------------------------------------------------------------------------
def make_layout(n_dim, im_dim, h_dim):
    block_dims = [(n_dim, h_dim), (h_dim, 2 * h_dim),
                  (2 * h_dim, 4 * h_dim), (4 * h_dim, 8 * h_dim)]
    final_in = 8 * h_dim
    out_pad = _round_up(im_dim, 128)            # lane-dense final output
    width = _round_up(max([d for _, d in block_dims] + [out_pad]), 128)

    row_offs, r = [], 0
    for din, _ in block_dims + [(final_in, out_pad)]:
        row_offs.append(r)
        r += _round_up(din, _W_ROW_ALIGN)
    total_rows = _round_up(r, _W_ROW_ALIGN)

    n_vecs = 2 * len(block_dims) + 1            # gamma/beta per block + final bias
    vec_rows = _round_up(n_vecs * _VEC_ROW_STRIDE, 8)

    return dict(block_dims=tuple(block_dims), final_in=final_in,
                im_dim=im_dim, out_pad=out_pad, width=width,
                row_offs=tuple(row_offs), total_rows=total_rows,
                vec_rows=vec_rows)


def pack_params(params, layout):
    """Pack all weights into one bf16 slab and all vectors into one f32 slab."""
    W = layout["width"]
    wp = jnp.zeros((layout["total_rows"], W), jnp.float32)
    for (w, _b, _g, _bt), off, (din, dout) in zip(
            params["blocks"], layout["row_offs"][:-1], layout["block_dims"]):
        wp = wp.at[off:off + din, :dout].set(w)
    wf, bf = params["final"]
    off_f = layout["row_offs"][-1]
    wp = wp.at[off_f:off_f + layout["final_in"], :wf.shape[1]].set(wf)
    wp = wp.astype(jnp.bfloat16)                 # MXU-native operand dtype

    vp = jnp.zeros((layout["vec_rows"], W), jnp.float32)
    for i, (_w, _b, gamma, beta) in enumerate(params["blocks"]):
        dout = gamma.shape[-1]
        vp = vp.at[(2 * i) * _VEC_ROW_STRIDE, :dout].set(gamma.reshape(-1))
        vp = vp.at[(2 * i + 1) * _VEC_ROW_STRIDE, :dout].set(beta.reshape(-1))
    vp = vp.at[2 * len(params["blocks"]) * _VEC_ROW_STRIDE, :bf.shape[-1]].set(
        bf.reshape(-1))
    return wp, vp


# ---------------------------------------------------------------------------
# Fused kernel: whole network in VMEM, single invocation (no grid).
# ---------------------------------------------------------------------------
def _make_kernel(layout, batch):
    block_dims = layout["block_dims"]
    row_offs = layout["row_offs"]
    final_in = layout["final_in"]
    out_pad = layout["out_pad"]
    inv_n = 1.0 / float(batch)
    bias_row = 2 * len(block_dims) * _VEC_ROW_STRIDE

    def kernel(x_ref, wp_ref, vp_ref, o_ref):
        h = x_ref[...]                                     # f32 (B, n_dim)
        for i, (din, dout) in enumerate(block_dims):
            off = row_offs[i]
            w = wp_ref[off:off + din, 0:dout]              # bf16 static view
            y = jnp.dot(h.astype(jnp.bfloat16), w,
                        preferred_element_type=jnp.float32)
            gamma = vp_ref[(2 * i) * _VEC_ROW_STRIDE:
                           (2 * i) * _VEC_ROW_STRIDE + 1, 0:dout]
            beta = vp_ref[(2 * i + 1) * _VEC_ROW_STRIDE:
                          (2 * i + 1) * _VEC_ROW_STRIDE + 1, 0:dout]
            # One-pass training-mode BN statistics (biased).
            s1 = jnp.sum(y, axis=0, keepdims=True)
            s2 = jnp.sum(y * y, axis=0, keepdims=True)
            mean = s1 * inv_n
            var = jnp.maximum(s2 * inv_n - mean * mean, 0.0)
            scale = gamma * jax.lax.rsqrt(var + BN_EPS)
            shift = beta - mean * scale
            h = jnp.maximum(y * scale + shift, 0.0)        # BN affine + ReLU

        off_f = row_offs[-1]
        wf = wp_ref[off_f:off_f + final_in, 0:out_pad]     # zero-padded, lane dense
        bf = vp_ref[bias_row:bias_row + 1, 0:out_pad]
        y = jnp.dot(h.astype(jnp.bfloat16), wf,
                    preferred_element_type=jnp.float32) + bf
        # Exact sigmoid via a single EUP op; output stays in [0, 1].
        o_ref[...] = 0.5 * jnp.tanh(0.5 * y) + 0.5

    return kernel


def generator_forward(packed_w, packed_v, noise, layout):
    batch = noise.shape[0]
    out_pad = layout["out_pad"]
    kernel = _make_kernel(layout, batch)

    flops = 2 * batch * (sum(di * do for di, do in layout["block_dims"])
                         + layout["final_in"] * out_pad)
    transcendentals = batch * out_pad + sum(do for _, do in layout["block_dims"])
    bytes_accessed = (noise.size * 4 + packed_w.size * 2 + packed_v.size * 4
                      + batch * out_pad * 4)

    out = pl.pallas_call(
        kernel,
        out_shape=jax.ShapeDtypeStruct((batch, out_pad), jnp.float32),
        in_specs=[_VMEM_SPEC, _VMEM_SPEC, _VMEM_SPEC],
        out_specs=_VMEM_SPEC,
        cost_estimate=pl.CostEstimate(flops=flops,
                                      transcendentals=transcendentals,
                                      bytes_accessed=bytes_accessed),
        # NOTE: when scaling the batch up (recommended: multiples of 128/256),
        # add pltpu.CompilerParams(vmem_limit_bytes=...) — v7x has only 64 MiB
        # physical VMEM, so its safe resident batch is ~half of v5e/v6e.
    )(noise, packed_w, packed_v)
    return out[:, :layout["im_dim"]]


# ---------------------------------------------------------------------------
# Parameter init (PyTorch-default-style) and pure-JAX reference.
# ---------------------------------------------------------------------------
def _init_linear(key, in_dim, out_dim):
    kw, kb = jax.random.split(key)
    bound = 1.0 / jnp.sqrt(jnp.float32(in_dim))
    w = jax.random.uniform(kw, (in_dim, out_dim), jnp.float32, -bound, bound)
    b = jax.random.uniform(kb, (out_dim,), jnp.float32, -bound, bound)
    return w, b


def init_generator_params(key, layout):
    params = {"blocks": [], "final": None}
    keys = jax.random.split(key, len(layout["block_dims"]) + 1)
    for k, (din, dout) in zip(keys[:-1], layout["block_dims"]):
        w, b = _init_linear(k, din, dout)
        gamma = jnp.ones((dout,), jnp.float32)    # BatchNorm1d weight init
        beta = jnp.zeros((dout,), jnp.float32)    # BatchNorm1d bias init
        params["blocks"].append((w, b, gamma, beta))
    params["final"] = _init_linear(keys[-1], layout["final_in"], layout["im_dim"])
    return params


def generator_reference(params, noise):
    h = noise
    for (w, b, gamma, beta) in params["blocks"]:
        y = h @ w + b                                       # bias kept here
        mean = jnp.mean(y, axis=0, keepdims=True)
        var = jnp.mean(jnp.square(y - mean), axis=0, keepdims=True)
        y = (y - mean) * jax.lax.rsqrt(var + BN_EPS) * gamma + beta
        h = jnp.maximum(y, 0.0)
    wf, bf = params["final"]
    return jax.nn.sigmoid(h @ wf + bf)


# ---------------------------------------------------------------------------
if __name__ == "__main__":
    # Small shapes consistent with the module structure:
    #   noise_dim=16, hidden_dim=32 (-> 64 -> 128 -> 256), image_dim=64, batch=8.
    batch, n_dim, h_dim, im_dim = 8, 16, 32, 64

    layout = make_layout(n_dim, im_dim, h_dim)
    key = jax.random.PRNGKey(0)
    k_params, k_noise = jax.random.split(key)
    params = init_generator_params(k_params, layout)
    noise = jax.random.normal(k_noise, (batch, n_dim), jnp.float32)

    packed_w, packed_v = pack_params(params, layout)

    fwd = functools.partial(generator_forward, layout=layout)
    out = jax.block_until_ready(fwd(packed_w, packed_v, noise))

    assert out.shape == (batch, im_dim), out.shape
    assert bool(jnp.all(jnp.isfinite(out))), "non-finite outputs"
    assert bool(jnp.all((out >= 0.0) & (out <= 1.0))), "sigmoid range violated"

    ref = generator_reference(params, noise)
    assert bool(jnp.allclose(out, ref, atol=3e-2)), (
        float(jnp.max(jnp.abs(out - ref))))

    print("KERNEL_OK")
</pallas_src>

<mosaic_0001>
module attributes {stable_mosaic.version = 11 : i64} {
  func.func @kernel(%arg0: memref<8x16xf32, #tpu.memory_space<vmem>>, %arg1: memref<496x256xbf16, #tpu.memory_space<vmem>>, %arg2: memref<72x256xf32, #tpu.memory_space<vmem>>, %arg3: memref<8x128xf32, #tpu.memory_space<vmem>>) attributes {dimension_semantics = [], scalar_prefetch = 0 : i64, scratch_operands = 0 : i64, tpu.core_type = #tpu.core_type<tc>} {
    %c0 = arith.constant 0 : index
    %c0_0 = arith.constant 0 : index
    %0 = vector.load %arg0[%c0, %c0_0] : memref<8x16xf32, #tpu.memory_space<vmem>>, vector<8x16xf32>
    %c0_1 = arith.constant 0 : index
    %c0_2 = arith.constant 0 : index
    %1 = vector.load %arg1[%c0_1, %c0_2] : memref<496x256xbf16, #tpu.memory_space<vmem>>, vector<16x32xbf16>
    %2 = arith.truncf %0 : vector<8x16xf32> to vector<8x16xbf16>
    %cst = arith.constant dense<0.000000e+00> : vector<8x32xf32>
    %3 = tpu.matmul %2, %1, %cst {dimension_numbers = #tpu.dot_dimension_numbers<[1], [0], [0], [1], [0, 0, 1, 1], [], []>} : vector<8x16xbf16>, vector<16x32xbf16>, vector<8x32xf32> -> vector<8x32xf32>
    %c0_3 = arith.constant 0 : index
    %c0_4 = arith.constant 0 : index
    %4 = vector.load %arg2[%c0_3, %c0_4] : memref<72x256xf32, #tpu.memory_space<vmem>>, vector<1x32xf32>
    %c8 = arith.constant 8 : index
    %c0_5 = arith.constant 0 : index
    %5 = vector.load %arg2[%c8, %c0_5] : memref<72x256xf32, #tpu.memory_space<vmem>>, vector<1x32xf32>
    %cst_6 = arith.constant dense<0.000000e+00> : vector<32xf32>
    %6 = vector.multi_reduction <add>, %3, %cst_6 [0] : vector<8x32xf32> to vector<32xf32>
    %7 = vector.shape_cast %6 : vector<32xf32> to vector<1x32xf32>
    %8 = arith.mulf %3, %3 : vector<8x32xf32>
    %cst_7 = arith.constant dense<0.000000e+00> : vector<32xf32>
    %9 = vector.multi_reduction <add>, %8, %cst_7 [0] : vector<8x32xf32> to vector<32xf32>
    %10 = vector.shape_cast %9 : vector<32xf32> to vector<1x32xf32>
    %cst_8 = arith.constant 1.250000e-01 : f32
    %11 = vector.broadcast %cst_8 : f32 to vector<1x32xf32>
    %12 = arith.mulf %7, %11 : vector<1x32xf32>
    %cst_9 = arith.constant 1.250000e-01 : f32
    %13 = vector.broadcast %cst_9 : f32 to vector<1x32xf32>
    %14 = arith.mulf %10, %13 : vector<1x32xf32>
    %15 = arith.mulf %12, %12 : vector<1x32xf32>
    %16 = arith.subf %14, %15 : vector<1x32xf32>
    %cst_10 = arith.constant 0.000000e+00 : f32
    %17 = vector.broadcast %cst_10 : f32 to vector<1x32xf32>
    %18 = arith.maximumf %16, %17 : vector<1x32xf32>
    %cst_11 = arith.constant 9.99999974E-6 : f32
    %19 = vector.broadcast %cst_11 : f32 to vector<1x32xf32>
    %20 = arith.addf %18, %19 : vector<1x32xf32>
    %21 = math.rsqrt %20 : vector<1x32xf32>
    %22 = arith.mulf %4, %21 : vector<1x32xf32>
    %23 = arith.mulf %12, %22 : vector<1x32xf32>
    %24 = arith.subf %5, %23 : vector<1x32xf32>
    %25 = vector.broadcast %22 : vector<1x32xf32> to vector<8x32xf32>
    %26 = arith.mulf %3, %25 : vector<8x32xf32>
    %27 = vector.broadcast %24 : vector<1x32xf32> to vector<8x32xf32>
    %28 = arith.addf %26, %27 : vector<8x32xf32>
    %cst_12 = arith.constant 0.000000e+00 : f32
    %29 = vector.broadcast %cst_12 : f32 to vector<8x32xf32>
    %30 = arith.maximumf %28, %29 : vector<8x32xf32>
    %c16 = arith.constant 16 : index
    %c0_13 = arith.constant 0 : index
    %31 = vector.load %arg1[%c16, %c0_13] : memref<496x256xbf16, #tpu.memory_space<vmem>>, vector<32x64xbf16>
    %32 = arith.truncf %30 : vector<8x32xf32> to vector<8x32xbf16>
    %cst_14 = arith.constant dense<0.000000e+00> : vector<8x64xf32>
    %33 = tpu.matmul %32, %31, %cst_14 {dimension_numbers = #tpu.dot_dimension_numbers<[1], [0], [0], [1], [0, 0, 1, 1], [], []>} : vector<8x32xbf16>, vector<32x64xbf16>, vector<8x64xf32> -> vector<8x64xf32>
    %c16_15 = arith.constant 16 : index
    %c0_16 = arith.constant 0 : index
    %34 = vector.load %arg2[%c16_15, %c0_16] : memref<72x256xf32, #tpu.memory_space<vmem>>, vector<1x64xf32>
    %c24 = arith.constant 24 : index
    %c0_17 = arith.constant 0 : index
    %35 = vector.load %arg2[%c24, %c0_17] : memref<72x256xf32, #tpu.memory_space<vmem>>, vector<1x64xf32>
    %cst_18 = arith.constant dense<0.000000e+00> : vector<64xf32>
    %36 = vector.multi_reduction <add>, %33, %cst_18 [0] : vector<8x64xf32> to vector<64xf32>
    %37 = vector.shape_cast %36 : vector<64xf32> to vector<1x64xf32>
    %38 = arith.mulf %33, %33 : vector<8x64xf32>
    %cst_19 = arith.constant dense<0.000000e+00> : vector<64xf32>
    %39 = vector.multi_reduction <add>, %38, %cst_19 [0] : vector<8x64xf32> to vector<64xf32>
    %40 = vector.shape_cast %39 : vector<64xf32> to vector<1x64xf32>
    %cst_20 = arith.constant 1.250000e-01 : f32
    %41 = vector.broadcast %cst_20 : f32 to vector<1x64xf32>
    %42 = arith.mulf %37, %41 : vector<1x64xf32>
    %cst_21 = arith.constant 1.250000e-01 : f32
    %43 = vector.broadcast %cst_21 : f32 to vector<1x64xf32>
    %44 = arith.mulf %40, %43 : vector<1x64xf32>
    %45 = arith.mulf %42, %42 : vector<1x64xf32>
    %46 = arith.subf %44, %45 : vector<1x64xf32>
    %cst_22 = arith.constant 0.000000e+00 : f32
    %47 = vector.broadcast %cst_22 : f32 to vector<1x64xf32>
    %48 = arith.maximumf %46, %47 : vector<1x64xf32>
    %cst_23 = arith.constant 9.99999974E-6 : f32
    %49 = vector.broadcast %cst_23 : f32 to vector<1x64xf32>
    %50 = arith.addf %48, %49 : vector<1x64xf32>
    %51 = math.rsqrt %50 : vector<1x64xf32>
    %52 = arith.mulf %34, %51 : vector<1x64xf32>
    %53 = arith.mulf %42, %52 : vector<1x64xf32>
    %54 = arith.subf %35, %53 : vector<1x64xf32>
    %55 = vector.broadcast %52 : vector<1x64xf32> to vector<8x64xf32>
    %56 = arith.mulf %33, %55 : vector<8x64xf32>
    %57 = vector.broadcast %54 : vector<1x64xf32> to vector<8x64xf32>
    %58 = arith.addf %56, %57 : vector<8x64xf32>
    %cst_24 = arith.constant 0.000000e+00 : f32
    %59 = vector.broadcast %cst_24 : f32 to vector<8x64xf32>
    %60 = arith.maximumf %58, %59 : vector<8x64xf32>
    %c48 = arith.constant 48 : index
    %c0_25 = arith.constant 0 : index
    %61 = vector.load %arg1[%c48, %c0_25] : memref<496x256xbf16, #tpu.memory_space<vmem>>, vector<64x128xbf16>
    %62 = arith.truncf %60 : vector<8x64xf32> to vector<8x64xbf16>
    %cst_26 = arith.constant dense<0.000000e+00> : vector<8x128xf32>
    %63 = tpu.matmul %62, %61, %cst_26 {dimension_numbers = #tpu.dot_dimension_numbers<[1], [0], [0], [1], [0, 0, 1, 1], [], []>} : vector<8x64xbf16>, vector<64x128xbf16>, vector<8x128xf32> -> vector<8x128xf32>
    %c32 = arith.constant 32 : index
    %c0_27 = arith.constant 0 : index
    %64 = vector.load %arg2[%c32, %c0_27] : memref<72x256xf32, #tpu.memory_space<vmem>>, vector<1x128xf32>
    %c40 = arith.constant 40 : index
    %c0_28 = arith.constant 0 : index
    %65 = vector.load %arg2[%c40, %c0_28] : memref<72x256xf32, #tpu.memory_space<vmem>>, vector<1x128xf32>
    %cst_29 = arith.constant dense<0.000000e+00> : vector<128xf32>
    %66 = vector.multi_reduction <add>, %63, %cst_29 [0] : vector<8x128xf32> to vector<128xf32>
    %67 = vector.shape_cast %66 : vector<128xf32> to vector<1x128xf32>
    %68 = arith.mulf %63, %63 : vector<8x128xf32>
    %cst_30 = arith.constant dense<0.000000e+00> : vector<128xf32>
    %69 = vector.multi_reduction <add>, %68, %cst_30 [0] : vector<8x128xf32> to vector<128xf32>
    %70 = vector.shape_cast %69 : vector<128xf32> to vector<1x128xf32>
    %cst_31 = arith.constant 1.250000e-01 : f32
    %71 = vector.broadcast %cst_31 : f32 to vector<1x128xf32>
    %72 = arith.mulf %67, %71 : vector<1x128xf32>
    %cst_32 = arith.constant 1.250000e-01 : f32
    %73 = vector.broadcast %cst_32 : f32 to vector<1x128xf32>
    %74 = arith.mulf %70, %73 : vector<1x128xf32>
    %75 = arith.mulf %72, %72 : vector<1x128xf32>
    %76 = arith.subf %74, %75 : vector<1x128xf32>
    %cst_33 = arith.constant 0.000000e+00 : f32
    %77 = vector.broadcast %cst_33 : f32 to vector<1x128xf32>
    %78 = arith.maximumf %76, %77 : vector<1x128xf32>
    %cst_34 = arith.constant 9.99999974E-6 : f32
    %79 = vector.broadcast %cst_34 : f32 to vector<1x128xf32>
    %80 = arith.addf %78, %79 : vector<1x128xf32>
    %81 = math.rsqrt %80 : vector<1x128xf32>
    %82 = arith.mulf %64, %81 : vector<1x128xf32>
    %83 = arith.mulf %72, %82 : vector<1x128xf32>
    %84 = arith.subf %65, %83 : vector<1x128xf32>
    %85 = vector.broadcast %82 : vector<1x128xf32> to vector<8x128xf32>
    %86 = arith.mulf %63, %85 : vector<8x128xf32>
    %87 = vector.broadcast %84 : vector<1x128xf32> to vector<8x128xf32>
    %88 = arith.addf %86, %87 : vector<8x128xf32>
    %cst_35 = arith.constant 0.000000e+00 : f32
    %89 = vector.broadcast %cst_35 : f32 to vector<8x128xf32>
    %90 = arith.maximumf %88, %89 : vector<8x128xf32>
    %c112 = arith.constant 112 : index
    %c0_36 = arith.constant 0 : index
    %91 = vector.load %arg1[%c112, %c0_36] : memref<496x256xbf16, #tpu.memory_space<vmem>>, vector<128x256xbf16>
    %92 = arith.truncf %90 : vector<8x128xf32> to vector<8x128xbf16>
    %cst_37 = arith.constant dense<0.000000e+00> : vector<8x256xf32>
    %93 = tpu.matmul %92, %91, %cst_37 {dimension_numbers = #tpu.dot_dimension_numbers<[1], [0], [0], [1], [0, 0, 1, 1], [], []>} : vector<8x128xbf16>, vector<128x256xbf16>, vector<8x256xf32> -> vector<8x256xf32>
    %c48_38 = arith.constant 48 : index
    %c0_39 = arith.constant 0 : index
    %94 = vector.load %arg2[%c48_38, %c0_39] : memref<72x256xf32, #tpu.memory_space<vmem>>, vector<1x256xf32>
    %c56 = arith.constant 56 : index
    %c0_40 = arith.constant 0 : index
    %95 = vector.load %arg2[%c56, %c0_40] : memref<72x256xf32, #tpu.memory_space<vmem>>, vector<1x256xf32>
    %cst_41 = arith.constant dense<0.000000e+00> : vector<256xf32>
    %96 = vector.multi_reduction <add>, %93, %cst_41 [0] : vector<8x256xf32> to vector<256xf32>
    %97 = vector.shape_cast %96 : vector<256xf32> to vector<1x256xf32>
    %98 = arith.mulf %93, %93 : vector<8x256xf32>
    %cst_42 = arith.constant dense<0.000000e+00> : vector<256xf32>
    %99 = vector.multi_reduction <add>, %98, %cst_42 [0] : vector<8x256xf32> to vector<256xf32>
    %100 = vector.shape_cast %99 : vector<256xf32> to vector<1x256xf32>
    %cst_43 = arith.constant 1.250000e-01 : f32
    %101 = vector.broadcast %cst_43 : f32 to vector<1x256xf32>
    %102 = arith.mulf %97, %101 : vector<1x256xf32>
    %cst_44 = arith.constant 1.250000e-01 : f32
    %103 = vector.broadcast %cst_44 : f32 to vector<1x256xf32>
    %104 = arith.mulf %100, %103 : vector<1x256xf32>
    %105 = arith.mulf %102, %102 : vector<1x256xf32>
    %106 = arith.subf %104, %105 : vector<1x256xf32>
    %cst_45 = arith.constant 0.000000e+00 : f32
    %107 = vector.broadcast %cst_45 : f32 to vector<1x256xf32>
    %108 = arith.maximumf %106, %107 : vector<1x256xf32>
    %cst_46 = arith.constant 9.99999974E-6 : f32
    %109 = vector.broadcast %cst_46 : f32 to vector<1x256xf32>
    %110 = arith.addf %108, %109 : vector<1x256xf32>
    %111 = math.rsqrt %110 : vector<1x256xf32>
    %112 = arith.mulf %94, %111 : vector<1x256xf32>
    %113 = arith.mulf %102, %112 : vector<1x256xf32>
    %114 = arith.subf %95, %113 : vector<1x256xf32>
    %115 = vector.broadcast %112 : vector<1x256xf32> to vector<8x256xf32>
    %116 = arith.mulf %93, %115 : vector<8x256xf32>
    %117 = vector.broadcast %114 : vector<1x256xf32> to vector<8x256xf32>
    %118 = arith.addf %116, %117 : vector<8x256xf32>
    %cst_47 = arith.constant 0.000000e+00 : f32
    %119 = vector.broadcast %cst_47 : f32 to vector<8x256xf32>
    %120 = arith.maximumf %118, %119 : vector<8x256xf32>
    %c240 = arith.constant 240 : index
    %c0_48 = arith.constant 0 : index
    %121 = vector.load %arg1[%c240, %c0_48] : memref<496x256xbf16, #tpu.memory_space<vmem>>, vector<256x128xbf16>
    %c64 = arith.constant 64 : index
    %c0_49 = arith.constant 0 : index
    %122 = vector.load %arg2[%c64, %c0_49] : memref<72x256xf32, #tpu.memory_space<vmem>>, vector<1x128xf32>
    %123 = arith.truncf %120 : vector<8x256xf32> to vector<8x256xbf16>
    %cst_50 = arith.constant dense<0.000000e+00> : vector<8x128xf32>
    %124 = tpu.matmul %123, %121, %cst_50 {dimension_numbers = #tpu.dot_dimension_numbers<[1], [0], [0], [1], [0, 0, 1, 1], [], []>} : vector<8x256xbf16>, vector<256x128xbf16>, vector<8x128xf32> -> vector<8x128xf32>
    %125 = vector.broadcast %122 : vector<1x128xf32> to vector<8x128xf32>
    %126 = arith.addf %124, %125 : vector<8x128xf32>
    %cst_51 = arith.constant 5.000000e-01 : f32
    %127 = vector.broadcast %cst_51 : f32 to vector<8x128xf32>
    %128 = arith.mulf %127, %126 : vector<8x128xf32>
    %129 = math.tanh %128 : vector<8x128xf32>
    %cst_52 = arith.constant 5.000000e-01 : f32
    %130 = vector.broadcast %cst_52 : f32 to vector<8x128xf32>
    %131 = arith.mulf %130, %129 : vector<8x128xf32>
    %cst_53 = arith.constant 5.000000e-01 : f32
    %132 = vector.broadcast %cst_53 : f32 to vector<8x128xf32>
    %133 = arith.addf %131, %132 : vector<8x128xf32>
    %c0_54 = arith.constant 0 : index
    %c0_55 = arith.constant 0 : index
    %134 = vector.load %arg3[%c0_54, %c0_55] : memref<8x128xf32, #tpu.memory_space<vmem>>, vector<8x128xf32>
    tpu.vector_store %arg3[%c0_54, %c0_55], %133 {strides = array<i32>} : memref<8x128xf32, #tpu.memory_space<vmem>>, vector<8x128xf32>,
    return
  }
}

</mosaic_0001>

<llo_original>
// kernel: tpu_custom_call.1
$region0: #{tpu_custom_call.1}
  #allocation0 [shape = 'u32[]', space=smem, size = 0x4, offset = 0x4, fixed_abs, tag = 'smem constant byte address 0x4 - core index']
  #allocation1 [shape = 'u32[144,128]{1,0:T(1,128)}', space=vmem, size = 0x12000, scoped, tag = 'internal scratch']
  %s0 = inlined_call_operand.hbm [shape: f32[8,16], index: 0, kind: input, shape index: {}]
  %s1 = inlined_call_operand.hbm [shape: bf16[496,256], index: 1, kind: input, shape index: {}]
  %s2 = inlined_call_operand.hbm [shape: f32[72,256], index: 2, kind: input, shape index: {}]
  %s3 = inlined_call_operand.hbm [shape: f32[8,128], index: 3, kind: output, shape index: {}]
  %s4 = sld [smem:[#allocation0]]
  $region34: #{tpu_custom_call.1} parent=0
    _
  %s6 = ssub.s32 1, %s4
  %s7 = scalar_select 0, %s6, %s4
  $region1: #{tpu_custom_call.1} parent=0
    #allocation2 [shape = 'u8[4096]{0}', space=vmem, size = 0x1000, scoped, tag = 'input window, operand 0, single buffered']
    #allocation3 [shape = 's32[1]{0}', space=sflag, size = 0x4, scoped, tag = 'scoped memory for tpu_custom_call.1']
    #allocation4 [shape = 's32[1]{0}', space=sflag, size = 0x4, scoped, tag = 'scoped memory for tpu_custom_call.1']
    #allocation5 [shape = 'u8[253952]{0}', space=vmem, size = 0x3e000, scoped, tag = 'input window, operand 1, single buffered']
    #allocation6 [shape = 's32[1]{0}', space=sflag, size = 0x4, scoped, tag = 'scoped memory for tpu_custom_call.1']
    #allocation7 [shape = 'u8[73728]{0}', space=vmem, size = 0x12000, scoped, tag = 'input window, operand 2, single buffered']
    #allocation8 [shape = 'u8[4096]{0}', space=vmem, size = 0x1000, scoped, tag = 'output window, operand 0, single buffered']
    %8 = vsyncpa [#allocation3], 0
    %9 = vsyncpa [#allocation6], 0
    %10 = vsyncpa [#allocation4], 0
    // Predicated region
    $region2: #{tpu_custom_call.1} parent=1 // pred_check
      _
    $region3: #{tpu_custom_call.1} parent=1 // pred_check_branch
      %12 = sbr.rel (0) target = $region5
    $region4: #{tpu_custom_call.1} parent=1 // pred_region
      %s14 = ssub.s32 128, 128
      %15 = vsyncadd [#allocation3], %s14
      %s17 = sshll.u32 [#allocation2], 4
      %s18 = int_to_ptr.vmem [resolvable:$true] %s17
      %20 = dma.hbm_to_vmem [thread:$0]  %s0, 128, %s18, [#allocation3]
    $region5: #{tpu_custom_call.1} parent=1 // pred_fallthru
      _
    // Predicated region
    $region6: #{tpu_custom_call.1} parent=1 // pred_check
      _
    $region7: #{tpu_custom_call.1} parent=1 // pred_check_branch
      %22 = sbr.rel (0) target = $region9
    $region8: #{tpu_custom_call.1} parent=1 // pred_region
      %s24 = ssub.s32 7936, 7936
      %25 = vsyncadd [#allocation6], %s24
      %s26 = sshll.u32 [#allocation5], 4
      %s27 = int_to_ptr.vmem [resolvable:$true] %s26
      %32 = dma.hbm_to_vmem [thread:$0]  %s1, 7936, %s27, [#allocation6], 128, 128, 8
    $region9: #{tpu_custom_call.1} parent=1 // pred_fallthru
      _
    // Predicated region
    $region10: #{tpu_custom_call.1} parent=1 // pred_check
      _
    $region11: #{tpu_custom_call.1} parent=1 // pred_check_branch
      %34 = sbr.rel (0) target = $region13
    $region12: #{tpu_custom_call.1} parent=1 // pred_region
      %s36 = ssub.s32 2304, 2304
      %37 = vsyncadd [#allocation6], %s36
      %s38 = sshll.u32 [#allocation7], 4
      %s39 = int_to_ptr.vmem [resolvable:$true] %s38
      %44 = dma.hbm_to_vmem [thread:$0]  %s2, 2304, %s39, [#allocation6], 256, 256, 16
    $region13: #{tpu_custom_call.1} parent=1 // pred_fallthru
      _
    // Predicated region
    $region14: #{tpu_custom_call.1} parent=1 // pred_check
      _
    $region15: #{tpu_custom_call.1} parent=1 // pred_check_branch
      %46 = sbr.rel (0) target = $region17
    $region16: #{tpu_custom_call.1} parent=1 // pred_region
      %47 = dma.done [#allocation3], 128
    $region17: #{tpu_custom_call.1} parent=1 // pred_fallthru
      _
    // Predicated region
    $region18: #{tpu_custom_call.1} parent=1 // pred_check
      _
    $region19: #{tpu_custom_call.1} parent=1 // pred_check_branch
      %49 = sbr.rel (0) target = $region21
    $region20: #{tpu_custom_call.1} parent=1 // pred_region
      %50 = dma.done [#allocation6], 7936
    $region21: #{tpu_custom_call.1} parent=1 // pred_fallthru
      _
    // Predicated region
    $region22: #{tpu_custom_call.1} parent=1 // pred_check
      _
    $region23: #{tpu_custom_call.1} parent=1 // pred_check_branch
      %52 = sbr.rel (0) target = $region25
    $region24: #{tpu_custom_call.1} parent=1 // pred_region
      %53 = dma.done [#allocation6], 2304
    $region25: #{tpu_custom_call.1} parent=1 // pred_fallthru
      _
    %v55 = vld [vmem:[#allocation2] sm:$0xff]
    %v56 = vld [vmem:[#allocation5] sm:$0xf]
    %v57 = vld [vmem:[#allocation5 + $0x8] sm:$0xf]
    %v58 = vpack.c.bf16 %v55, %v55
    %v61 = vunpack.c.l.b16 %v56
    %v62 = vunpack.c.l.b16 %v57
    %v63 = vpack.c.b16 %v62, %v61
    %vm65 = vcmask 130048
    %v67 = vsel %vm65, %v58, 0
    %69 = vmatprep.subr.bf16.mxu0 0
    %70 = vmatpush1.bf16.msra.mxu0 %v63
    %71 = vmatprep.subr.bf16.mxu0 0
    %72 = vmatpush1.bf16.msra.mxu0 0
    %73 = vmatprep.subr.bf16.mxu0 0
    %74 = vmatpush1.bf16.msra.mxu0 0
    %75 = vmatprep.subr.bf16.mxu0 0
    %76 = vmatpush1.bf16.msra.mxu0 0
    %77 = vmatprep.subr.bf16.mxu0 0
    %78 = vmatpush1.bf16.msra.mxu0 0
    %79 = vmatprep.subr.bf16.mxu0 0
    %80 = vmatpush1.bf16.msra.mxu0 0
    %81 = vmatprep.subr.bf16.mxu0 0
    %82 = vmatpush1.bf16.msra.mxu0 0
    %83 = vmatprep.subr.bf16.mxu0 0
    %84 = vmatpush1.bf16.msra.mxu0 0
    %85 = vmatprep.subr.bf16.mxu0 0
    %86 = vmatpush1.bf16.msra.mxu0 0
    %87 = vmatprep.subr.bf16.mxu0 0
    %88 = vmatpush1.bf16.msra.mxu0 0
    %89 = vmatprep.subr.bf16.mxu0 0
    %90 = vmatpush1.bf16.msra.mxu0 0
    %91 = vmatprep.subr.bf16.mxu0 0
    %92 = vmatpush1.bf16.msra.mxu0 0
    %93 = vmatprep.subr.bf16.mxu0 0
    %94 = vmatpush1.bf16.msra.mxu0 0
    %95 = vmatprep.subr.bf16.mxu0 0
    %96 = vmatpush1.bf16.msra.mxu0 0
    %97 = vmatprep.subr.bf16.mxu0 0
    %98 = vmatpush1.bf16.msra.mxu0 0
    %99 = vmatprep.subr.bf16.mxu0 0
    %100 = vmatpush1.bf16.msra.mxu0 0
    %101 = vmatprep.mubr.bf16.mxu0 0
    %102 = vmatmul.mubr.bf16.gmra.mrb[0].mxu0 %v67
    %v103 = vpop.f32.mrb[0].mxu0
    %v104 = vadd.f32 0.0, %v103
    %v105 = vpop.f32.mrb[0].mxu0
    %v106 = vpop.f32.mrb[0].mxu0
    %v107 = vpop.f32.mrb[0].mxu0
    %108 = vdwg.mxu0
    %v109 = vld [vmem:[#allocation7] ss:$0 sm:$0xff]
    %v110 = vld [vmem:[#allocation7 + $0x10] ss:$0 sm:$0xff]
    %vm111 = vcmask 261120
    %v112 = vsel %vm111, %v104, 0.0
    %v113 = vrot.slane %v112, 4
    %v114 = vadd.f32 %v112, %v113
    %v115 = vrot.slane %v114, 2
    %v116 = vadd.f32 %v114, %v115
    %v117 = vrot.slane %v116, 1
    %v118 = vadd.f32 %v116, %v117
    %v119 = vmul.f32 %v104, %v104
    %v120 = vsel %vm111, %v119, 0.0
    %v121 = vrot.slane %v120, 4
    %v122 = vadd.f32 %v120, %v121
    %v123 = vrot.slane %v122, 2
    %v124 = vadd.f32 %v122, %v123
    %v125 = vrot.slane %v124, 1
    %v126 = vadd.f32 %v124, %v125
    %v127 = vmul.f32 %v118, 0.125
    %v128 = vmul.f32 %v126, 0.125
    %v129 = vmul.f32 %v127, %v127
    %v130 = vsub.f32 %v128, %v129
    %v131 = vmax.f32 %v130, 0.0
    %v132 = vadd.f32 %v131, 1e-05
    %v133 = vrsqrt.pop %v132
    %v134 = vmul.f32 %v109, %v133
    %v135 = vmul.f32 %v127, %v134
    %v136 = vsub.f32 %v110, %v135
    %v137 = vmul.f32 %v104, %v134
    %v138 = vadd.f32 %v137, %v136
    %v139 = vmax.f32 %v138, 0.0
    %v140 = vld [vmem:[#allocation5 + $0x10] sm:$0xf]
    %v141 = vld [vmem:[#allocation5 + $0x18] sm:$0xf]
    %v142 = vld [vmem:[#allocation5 + $0x20] sm:$0xf]
    %v143 = vld [vmem:[#allocation5 + $0x28] sm:$0xf]
    %v144 = vpack.c.bf16 %v139, %v139
    %v149 = vunpack.c.l.b16 %v140
    %v150 = vunpack.c.l.b16 %v141
    %v151 = vunpack.c.l.b16 %v142
    %v152 = vunpack.c.l.b16 %v143
    %v153 = vpack.c.b16 %v150, %v149
    %v154 = vpack.c.b16 %v152, %v151
    %v158 = vsel %vm111, %v144, 0
    %160 = vmatprep.subr.bf16.mxu0 0
    %161 = vmatpush1.bf16.msra.mxu0 %v153
    %162 = vmatprep.subr.bf16.mxu0 0
    %163 = vmatpush1.bf16.msra.mxu0 %v154
    %164 = vmatprep.subr.bf16.mxu0 0
    %165 = vmatpush1.bf16.msra.mxu0 0
    %166 = vmatprep.subr.bf16.mxu0 0
    %167 = vmatpush1.bf16.msra.mxu0 0
    %168 = vmatprep.subr.bf16.mxu0 0
    %169 = vmatpush1.bf16.msra.mxu0 0
    %170 = vmatprep.subr.bf16.mxu0 0
    %171 = vmatpush1.bf16.msra.mxu0 0
    %172 = vmatprep.subr.bf16.mxu0 0
    %173 = vmatpush1.bf16.msra.mxu0 0
    %174 = vmatprep.subr.bf16.mxu0 0
    %175 = vmatpush1.bf16.msra.mxu0 0
    %176 = vmatprep.subr.bf16.mxu0 0
    %177 = vmatpush1.bf16.msra.mxu0 0
    %178 = vmatprep.subr.bf16.mxu0 0
    %179 = vmatpush1.bf16.msra.mxu0 0
    %180 = vmatprep.subr.bf16.mxu0 0
    %181 = vmatpush1.bf16.msra.mxu0 0
    %182 = vmatprep.subr.bf16.mxu0 0
    %183 = vmatpush1.bf16.msra.mxu0 0
    %184 = vmatprep.subr.bf16.mxu0 0
    %185 = vmatpush1.bf16.msra.mxu0 0
    %186 = vmatprep.subr.bf16.mxu0 0
    %187 = vmatpush1.bf16.msra.mxu0 0
    %188 = vmatprep.subr.bf16.mxu0 0
    %189 = vmatpush1.bf16.msra.mxu0 0
    %190 = vmatprep.subr.bf16.mxu0 0
    %191 = vmatpush1.bf16.msra.mxu0 0
    %192 = vmatprep.mubr.bf16.mxu0 0
    %193 = vmatmul.mubr.bf16.gmra.mrb[0].mxu0 %v158
    %v194 = vpop.f32.mrb[0].mxu0
    %v195 = vadd.f32 0.0, %v194
    %v196 = vpop.f32.mrb[0].mxu0
    %v197 = vpop.f32.mrb[0].mxu0
    %v198 = vpop.f32.mrb[0].mxu0
    %199 = vdwg.mxu0
    %v200 = vld [vmem:[#allocation7 + $0x20] ss:$0 sm:$0xff]
    %v201 = vld [vmem:[#allocation7 + $0x30] ss:$0 sm:$0xff]
    %vm202 = vcmask 523264
    %v203 = vsel %vm202, %v195, 0.0
    %v204 = vrot.slane %v203, 4
    %v205 = vadd.f32 %v203, %v204
    %v206 = vrot.slane %v205, 2
    %v207 = vadd.f32 %v205, %v206
    %v208 = vrot.slane %v207, 1
    %v209 = vadd.f32 %v207, %v208
    %v210 = vmul.f32 %v195, %v195
    %v211 = vsel %vm202, %v210, 0.0
    %v212 = vrot.slane %v211, 4
    %v213 = vadd.f32 %v211, %v212
    %v214 = vrot.slane %v213, 2
    %v215 = vadd.f32 %v213, %v214
    %v216 = vrot.slane %v215, 1
    %v217 = vadd.f32 %v215, %v216
    %v218 = vmul.f32 %v209, 0.125
    %v219 = vmul.f32 %v217, 0.125
    %v220 = vmul.f32 %v218, %v218
    %v221 = vsub.f32 %v219, %v220
    %v222 = vmax.f32 %v221, 0.0
    %v223 = vadd.f32 %v222, 1e-05
    %v224 = vrsqrt.pop %v223
    %v225 = vmul.f32 %v200, %v224
    %v226 = vmul.f32 %v218, %v225
    %v227 = vsub.f32 %v201, %v226
    %v228 = vmul.f32 %v195, %v225
    %v229 = vadd.f32 %v228, %v227
    %v230 = vmax.f32 %v229, 0.0
    %v231 = vld [vmem:[#allocation5 + $0x30] sm:$0xf]
    %v232 = vld [vmem:[#allocation5 + $0x38] sm:$0xf]
    %v233 = vld [vmem:[#allocation5 + $0x40] sm:$0xf]
    %v234 = vld [vmem:[#allocation5 + $0x48] sm:$0xf]
    %v235 = vld [vmem:[#allocation5 + $0x50] sm:$0xf]
    %v236 = vld [vmem:[#allocation5 + $0x58] sm:$0xf]
    %v237 = vld [vmem:[#allocation5 + $0x60] sm:$0xf]
    %v238 = vld [vmem:[#allocation5 + $0x68] sm:$0xf]
    %v239 = vpack.c.bf16 %v230, %v230
    %v248 = vunpack.c.l.b16 %v231
    %v249 = vunpack.c.l.b16 %v232
    %v250 = vunpack.c.l.b16 %v233
    %v251 = vunpack.c.l.b16 %v234
    %v252 = vunpack.c.l.b16 %v235
    %v253 = vunpack.c.l.b16 %v236
    %v254 = vunpack.c.l.b16 %v237
    %v255 = vunpack.c.l.b16 %v238
    %v256 = vpack.c.b16 %v249, %v248
    %v257 = vpack.c.b16 %v251, %v250
    %v258 = vpack.c.b16 %v253, %v252
    %v259 = vpack.c.b16 %v255, %v254
    %v265 = vsel %vm202, %v239, 0
    %267 = vmatprep.subr.bf16.mxu0 0
    %268 = vmatpush1.bf16.msra.mxu0 %v256
    %269 = vmatprep.subr.bf16.mxu0 0
    %270 = vmatpush1.bf16.msra.mxu0 %v257
    %271 = vmatprep.subr.bf16.mxu0 0
    %272 = vmatpush1.bf16.msra.mxu0 %v258
    %273 = vmatprep.subr.bf16.mxu0 0
    %274 = vmatpush1.bf16.msra.mxu0 %v259
    %275 = vmatprep.subr.bf16.mxu0 0
    %276 = vmatpush1.bf16.msra.mxu0 0
    %277 = vmatprep.subr.bf16.mxu0 0
    %278 = vmatpush1.bf16.msra.mxu0 0
    %279 = vmatprep.subr.bf16.mxu0 0
    %280 = vmatpush1.bf16.msra.mxu0 0
    %281 = vmatprep.subr.bf16.mxu0 0
    %282 = vmatpush1.bf16.msra.mxu0 0
    %283 = vmatprep.subr.bf16.mxu0 0
    %284 = vmatpush1.bf16.msra.mxu0 0
    %285 = vmatprep.subr.bf16.mxu0 0
    %286 = vmatpush1.bf16.msra.mxu0 0
    %287 = vmatprep.subr.bf16.mxu0 0
    %288 = vmatpush1.bf16.msra.mxu0 0
    %289 = vmatprep.subr.bf16.mxu0 0
    %290 = vmatpush1.bf16.msra.mxu0 0
    %291 = vmatprep.subr.bf16.mxu0 0
    %292 = vmatpush1.bf16.msra.mxu0 0
    %293 = vmatprep.subr.bf16.mxu0 0
    %294 = vmatpush1.bf16.msra.mxu0 0
    %295 = vmatprep.subr.bf16.mxu0 0
    %296 = vmatpush1.bf16.msra.mxu0 0
    %297 = vmatprep.subr.bf16.mxu0 0
    %298 = vmatpush1.bf16.msra.mxu0 0
    %299 = vmatprep.mubr.bf16.mxu0 0
    %300 = vmatmul.mubr.bf16.gmra.mrb[0].mxu0 %v265
    %v301 = vpop.f32.mrb[0].mxu0
    %v302 = vadd.f32 0.0, %v301
    %v303 = vpop.f32.mrb[0].mxu0
    %v304 = vpop.f32.mrb[0].mxu0
    %v305 = vpop.f32.mrb[0].mxu0
    %306 = vdwg.mxu0
    %v307 = vld [vmem:[#allocation7 + $0x40] ss:$0 sm:$0xff]
    %v308 = vld [vmem:[#allocation7 + $0x50] ss:$0 sm:$0xff]
    %v309 = vrot.slane %v302, 4
    %v310 = vadd.f32 %v302, %v309
    %v311 = vrot.slane %v310, 2
    %v312 = vadd.f32 %v310, %v311
    %v313 = vrot.slane %v312, 1
    %v314 = vadd.f32 %v312, %v313
    %v315 = vmul.f32 %v302, %v302
    %v316 = vrot.slane %v315, 4
    %v317 = vadd.f32 %v315, %v316
    %v318 = vrot.slane %v317, 2
    %v319 = vadd.f32 %v317, %v318
    %v320 = vrot.slane %v319, 1
    %v321 = vadd.f32 %v319, %v320
    %v322 = vmul.f32 %v314, 0.125
    %v323 = vmul.f32 %v321, 0.125
    %v324 = vmul.f32 %v322, %v322
    %v325 = vsub.f32 %v323, %v324
    %v326 = vmax.f32 %v325, 0.0
    %v327 = vadd.f32 %v326, 1e-05
    %v328 = vrsqrt.pop %v327
    %v329 = vmul.f32 %v307, %v328
    %v330 = vmul.f32 %v322, %v329
    %v331 = vsub.f32 %v308, %v330
    %v332 = vmul.f32 %v302, %v329
    %v333 = vadd.f32 %v332, %v331
    %v334 = vmax.f32 %v333, 0.0
    %v335 = vld [vmem:[#allocation5 + $0x70] sm:$0xff]
    %v336 = vld [vmem:[#allocation5 + $0x78] sm:$0xff]
    %v337 = vld [vmem:[#allocation5 + $0x80] sm:$0xff]
    %v338 = vld [vmem:[#allocation5 + $0x88] sm:$0xff]
    %v339 = vld [vmem:[#allocation5 + $0x90] sm:$0xff]
    %v340 = vld [vmem:[#allocation5 + $0x98] sm:$0xff]
    %v341 = vld [vmem:[#allocation5 + $0xa0] sm:$0xff]
    %v342 = vld [vmem:[#allocation5 + $0xa8] sm:$0xff]
    %v343 = vld [vmem:[#allocation5 + $0xb0] sm:$0xff]
    %v344 = vld [vmem:[#allocation5 + $0xb8] sm:$0xff]
    %v345 = vld [vmem:[#allocation5 + $0xc0] sm:$0xff]
    %v346 = vld [vmem:[#allocation5 + $0xc8] sm:$0xff]
    %v347 = vld [vmem:[#allocation5 + $0xd0] sm:$0xff]
    %v348 = vld [vmem:[#allocation5 + $0xd8] sm:$0xff]
    %v349 = vld [vmem:[#allocation5 + $0xe0] sm:$0xff]
    %v350 = vld [vmem:[#allocation5 + $0xe8] sm:$0xff]
    %v351 = vpack.c.bf16 %v334, %v334
    %v368 = vunpack.c.l.b16 %v335
    %v369 = vunpack.c.h.b16 %v335
    %v370 = vunpack.c.l.b16 %v336
    %v371 = vunpack.c.h.b16 %v336
    %v372 = vunpack.c.l.b16 %v337
    %v373 = vunpack.c.h.b16 %v337
    %v374 = vunpack.c.l.b16 %v338
    %v375 = vunpack.c.h.b16 %v338
    %v376 = vunpack.c.l.b16 %v339
    %v377 = vunpack.c.h.b16 %v339
    %v378 = vunpack.c.l.b16 %v340
    %v379 = vunpack.c.h.b16 %v340
    %v380 = vunpack.c.l.b16 %v341
    %v381 = vunpack.c.h.b16 %v341
    %v382 = vunpack.c.l.b16 %v342
    %v383 = vunpack.c.h.b16 %v342
    %v384 = vunpack.c.l.b16 %v343
    %v385 = vunpack.c.h.b16 %v343
    %v386 = vunpack.c.l.b16 %v344
    %v387 = vunpack.c.h.b16 %v344
    %v388 = vunpack.c.l.b16 %v345
    %v389 = vunpack.c.h.b16 %v345
    %v390 = vunpack.c.l.b16 %v346
    %v391 = vunpack.c.h.b16 %v346
    %v392 = vunpack.c.l.b16 %v347
    %v393 = vunpack.c.h.b16 %v347
    %v394 = vunpack.c.l.b16 %v348
    %v395 = vunpack.c.h.b16 %v348
    %v396 = vunpack.c.l.b16 %v349
    %v397 = vunpack.c.h.b16 %v349
    %v398 = vunpack.c.l.b16 %v350
    %v399 = vunpack.c.h.b16 %v350
    %v400 = vpack.c.b16 %v370, %v368
    %v401 = vpack.c.b16 %v371, %v369
    %v402 = vpack.c.b16 %v374, %v372
    %v403 = vpack.c.b16 %v375, %v373
    %v404 = vpack.c.b16 %v378, %v376
    %v405 = vpack.c.b16 %v379, %v377
    %v406 = vpack.c.b16 %v382, %v380
    %v407 = vpack.c.b16 %v383, %v381
    %v408 = vpack.c.b16 %v386, %v384
    %v409 = vpack.c.b16 %v387, %v385
    %v410 = vpack.c.b16 %v390, %v388
    %v411 = vpack.c.b16 %v391, %v389
    %v412 = vpack.c.b16 %v394, %v392
    %v413 = vpack.c.b16 %v395, %v393
    %v414 = vpack.c.b16 %v398, %v396
    %v415 = vpack.c.b16 %v399, %v397
    %432 = vmatprep.subr.bf16.mxu0 %v401
    %433 = vmatpush1.bf16.msra.mxu0 %v400
    %434 = vmatprep.subr.bf16.mxu0 %v403
    %435 = vmatpush1.bf16.msra.mxu0 %v402
    %436 = vmatprep.subr.bf16.mxu0 %v405
    %437 = vmatpush1.bf16.msra.mxu0 %v404
    %438 = vmatprep.subr.bf16.mxu0 %v407
    %439 = vmatpush1.bf16.msra.mxu0 %v406
    %440 = vmatprep.subr.bf16.mxu0 %v409
    %441 = vmatpush1.bf16.msra.mxu0 %v408
    %442 = vmatprep.subr.bf16.mxu0 %v411
    %443 = vmatpush1.bf16.msra.mxu0 %v410
    %444 = vmatprep.subr.bf16.mxu0 %v413
    %445 = vmatpush1.bf16.msra.mxu0 %v412
    %446 = vmatprep.subr.bf16.mxu0 %v415
    %447 = vmatpush1.bf16.msra.mxu0 %v414
    %448 = vmatprep.subr.bf16.mxu0 0
    %449 = vmatpush1.bf16.msra.mxu0 0
    %450 = vmatprep.subr.bf16.mxu0 0
    %451 = vmatpush1.bf16.msra.mxu0 0
    %452 = vmatprep.subr.bf16.mxu0 0
    %453 = vmatpush1.bf16.msra.mxu0 0
    %454 = vmatprep.subr.bf16.mxu0 0
    %455 = vmatpush1.bf16.msra.mxu0 0
    %456 = vmatprep.subr.bf16.mxu0 0
    %457 = vmatpush1.bf16.msra.mxu0 0
    %458 = vmatprep.subr.bf16.mxu0 0
    %459 = vmatpush1.bf16.msra.mxu0 0
    %460 = vmatprep.subr.bf16.mxu0 0
    %461 = vmatpush1.bf16.msra.mxu0 0
    %462 = vmatprep.subr.bf16.mxu0 0
    %463 = vmatpush1.bf16.msra.mxu0 0
    %464 = vmatprep.mubr.bf16.mxu0 0
    %465 = vmatmul.mubr.bf16.gmra.mrb[0].mxu0 %v351
    %v466 = vpop.f32.mrb[0].mxu0
    %v467 = vadd.f32 0.0, %v466
    %v468 = vpop.f32.mrb[0].mxu0
    %v469 = vadd.f32 0.0, %v468
    %v470 = vpop.f32.mrb[0].mxu0
    %v471 = vpop.f32.mrb[0].mxu0
    %472 = vdwg.mxu0
    %s473 = scalar_lea.vmem [#allocation7], 96
    %v474 = vld [vmem:[%s473] ss:$8 sm:$0x3]
    %s475 = scalar_lea.vmem [#allocation7], 112
    %v476 = vld [vmem:[%s475] ss:$8 sm:$0x3]
    %v477 = vrot.slane %v467, 4
    %v478 = vadd.f32 %v467, %v477
    %v479 = vrot.slane %v478, 2
    %v480 = vadd.f32 %v478, %v479
    %v481 = vrot.slane %v480, 1
    %v482 = vadd.f32 %v480, %v481
    %v483 = vrot.slane %v469, 4
    %v484 = vadd.f32 %v469, %v483
    %v485 = vrot.slane %v484, 2
    %v486 = vadd.f32 %v484, %v485
    %v487 = vrot.slane %v486, 1
    %v488 = vadd.f32 %v486, %v487
    %v489 = vmul.f32 %v467, %v467
    %v490 = vmul.f32 %v469, %v469
    %v491 = vrot.slane %v489, 4
    %v492 = vadd.f32 %v489, %v491
    %v493 = vrot.slane %v492, 2
    %v494 = vadd.f32 %v492, %v493
    %v495 = vrot.slane %v494, 1
    %v496 = vadd.f32 %v494, %v495
    %v497 = vrot.slane %v490, 4
    %v498 = vadd.f32 %v490, %v497
    %v499 = vrot.slane %v498, 2
    %v500 = vadd.f32 %v498, %v499
    %v501 = vrot.slane %v500, 1
    %v502 = vadd.f32 %v500, %v501
    %v503 = vmul.f32 %v482, 0.125
    %v504 = vmul.f32 %v488, 0.125
    %v505 = vmul.f32 %v496, 0.125
    %v506 = vmul.f32 %v502, 0.125
    %v507 = vmul.f32 %v503, %v503
    %v508 = vmul.f32 %v504, %v504
    %v509 = vsub.f32 %v505, %v507
    %v510 = vsub.f32 %v506, %v508
    %v511 = vmax.f32 %v509, 0.0
    %v512 = vmax.f32 %v510, 0.0
    %v513 = vadd.f32 %v511, 1e-05
    %v514 = vadd.f32 %v512, 1e-05
    %v515 = vrsqrt.pop %v513
    %v516 = vrsqrt.pop %v514
    %v519 = vcombine.low %v515, %v516
    %v521 = vunpack.c.l.s4 1966171168
    %v522 = vunpack.c.0.s8 %v521
    %v523 = vlaneseq
    %v524 = vshrl.u32 %v523, 7
    %v525 = vsub.s32 %v522, %v524
    %v526 = vrot.slane %v519, %v525
    %v528 = vunpack.c.l.s4 1966171168
    %v529 = vunpack.c.0.s8 %v528
    %v530 = vlaneseq
    %v531 = vshrl.u32 %v530, 7
    %v532 = vsub.s32 %v529, %v531
    %v533 = vrot.slane %v526, %v532
    %v535 = vmul.f32 %v474, %v533
    %v537 = vlaneseq
    %v538 = vshrl.u32 %v537, 7
    %v539 = vsub.s32 0, %v538
    %v540 = vrot.slane %v535, %v539
    %v541 = vlaneseq
    %v542 = vshrl.u32 %v541, 7
    %v543 = vsub.s32 1, %v542
    %v544 = vrot.slane %v535, %v543
    %v547 = vmul.f32 %v503, %v540
    %v548 = vmul.f32 %v504, %v544
    %v551 = vcombine.low %v547, %v548
    %v553 = vunpack.c.l.s4 1966171168
    %v554 = vunpack.c.0.s8 %v553
    %v555 = vlaneseq
    %v556 = vshrl.u32 %v555, 7
    %v557 = vsub.s32 %v554, %v556
    %v558 = vrot.slane %v551, %v557
    %v560 = vunpack.c.l.s4 1966171168
    %v561 = vunpack.c.0.s8 %v560
    %v562 = vlaneseq
    %v563 = vshrl.u32 %v562, 7
    %v564 = vsub.s32 %v561, %v563
    %v565 = vrot.slane %v558, %v564
    %v567 = vsub.f32 %v476, %v565
    %v568 = vmul.f32 %v467, %v540
    %v569 = vmul.f32 %v469, %v544
    %v571 = vlaneseq
    %v572 = vshrl.u32 %v571, 7
    %v573 = vsub.s32 0, %v572
    %v574 = vrot.slane %v567, %v573
    %v575 = vlaneseq
    %v576 = vshrl.u32 %v575, 7
    %v577 = vsub.s32 1, %v576
    %v578 = vrot.slane %v567, %v577
    %v581 = vadd.f32 %v568, %v574
    %v582 = vadd.f32 %v569, %v578
    %v583 = vmax.f32 %v581, 0.0
    %v584 = vmax.f32 %v582, 0.0
    %v585 = vld [vmem:[#allocation5 + $0xf0] sm:$0xf]
    %v586 = vld [vmem:[#allocation5 + $0xf8] sm:$0xf]
    %v587 = vld [vmem:[#allocation5 + $0x100] sm:$0xf]
    %v588 = vld [vmem:[#allocation5 + $0x108] sm:$0xf]
    %v589 = vld [vmem:[#allocation5 + $0x110] sm:$0xf]
    %v590 = vld [vmem:[#allocation5 + $0x118] sm:$0xf]
    %v591 = vld [vmem:[#allocation5 + $0x120] sm:$0xf]
    %v592 = vld [vmem:[#allocation5 + $0x128] sm:$0xf]
    %v593 = vld [vmem:[#allocation5 + $0x130] sm:$0xf]
    %v594 = vld [vmem:[#allocation5 + $0x138] sm:$0xf]
    %v595 = vld [vmem:[#allocation5 + $0x140] sm:$0xf]
    %v596 = vld [vmem:[#allocation5 + $0x148] sm:$0xf]
    %v597 = vld [vmem:[#allocation5 + $0x150] sm:$0xf]
    %v598 = vld [vmem:[#allocation5 + $0x158] sm:$0xf]
    %v599 = vld [vmem:[#allocation5 + $0x160] sm:$0xf]
    %v600 = vld [vmem:[#allocation5 + $0x168] sm:$0xf]
    %v601 = vld [vmem:[#allocation5 + $0x170] sm:$0xf]
    %v602 = vld [vmem:[#allocation5 + $0x178] sm:$0xf]
    %v603 = vld [vmem:[#allocation5 + $0x180] sm:$0xf]
    %v604 = vld [vmem:[#allocation5 + $0x188] sm:$0xf]
    %v605 = vld [vmem:[#allocation5 + $0x190] sm:$0xf]
    %v606 = vld [vmem:[#allocation5 + $0x198] sm:$0xf]
    %v607 = vld [vmem:[#allocation5 + $0x1a0] sm:$0xf]
    %v608 = vld [vmem:[#allocation5 + $0x1a8] sm:$0xf]
    %v609 = vld [vmem:[#allocation5 + $0x1b0] sm:$0xf]
    %v610 = vld [vmem:[#allocation5 + $0x1b8] sm:$0xf]
    %v611 = vld [vmem:[#allocation5 + $0x1c0] sm:$0xf]
    %v612 = vld [vmem:[#allocation5 + $0x1c8] sm:$0xf]
    %v613 = vld [vmem:[#allocation5 + $0x1d0] sm:$0xf]
    %v614 = vld [vmem:[#allocation5 + $0x1d8] sm:$0xf]
    %v615 = vld [vmem:[#allocation5 + $0x1e0] sm:$0xf]
    %v616 = vld [vmem:[#allocation5 + $0x1e8] sm:$0xf]
    %v617 = vld [vmem:[#allocation7 + $0x80] ss:$0 sm:$0xff]
    %v618 = vpack.c.bf16 %v583, %v583
    %v619 = vpack.c.bf16 %v584, %v584
    %v652 = vunpack.c.l.b16 %v585
    %v653 = vunpack.c.l.b16 %v586
    %v654 = vunpack.c.l.b16 %v587
    %v655 = vunpack.c.l.b16 %v588
    %v656 = vunpack.c.l.b16 %v589
    %v657 = vunpack.c.l.b16 %v590
    %v658 = vunpack.c.l.b16 %v591
    %v659 = vunpack.c.l.b16 %v592
    %v660 = vunpack.c.l.b16 %v593
    %v661 = vunpack.c.l.b16 %v594
    %v662 = vunpack.c.l.b16 %v595
    %v663 = vunpack.c.l.b16 %v596
    %v664 = vunpack.c.l.b16 %v597
    %v665 = vunpack.c.l.b16 %v598
    %v666 = vunpack.c.l.b16 %v599
    %v667 = vunpack.c.l.b16 %v600
    %v668 = vunpack.c.l.b16 %v601
    %v669 = vunpack.c.l.b16 %v602
    %v670 = vunpack.c.l.b16 %v603
    %v671 = vunpack.c.l.b16 %v604
    %v672 = vunpack.c.l.b16 %v605
    %v673 = vunpack.c.l.b16 %v606
    %v674 = vunpack.c.l.b16 %v607
    %v675 = vunpack.c.l.b16 %v608
    %v676 = vunpack.c.l.b16 %v609
    %v677 = vunpack.c.l.b16 %v610
    %v678 = vunpack.c.l.b16 %v611
    %v679 = vunpack.c.l.b16 %v612
    %v680 = vunpack.c.l.b16 %v613
    %v681 = vunpack.c.l.b16 %v614
    %v682 = vunpack.c.l.b16 %v615
    %v683 = vunpack.c.l.b16 %v616
    %v684 = vpack.c.b16 %v653, %v652
    %v685 = vpack.c.b16 %v655, %v654
    %v686 = vpack.c.b16 %v657, %v656
    %v687 = vpack.c.b16 %v659, %v658
    %v688 = vpack.c.b16 %v661, %v660
    %v689 = vpack.c.b16 %v663, %v662
    %v690 = vpack.c.b16 %v665, %v664
    %v691 = vpack.c.b16 %v667, %v666
    %v692 = vpack.c.b16 %v669, %v668
    %v693 = vpack.c.b16 %v671, %v670
    %v694 = vpack.c.b16 %v673, %v672
    %v695 = vpack.c.b16 %v675, %v674
    %v696 = vpack.c.b16 %v677, %v676
    %v697 = vpack.c.b16 %v679, %v678
    %v698 = vpack.c.b16 %v681, %v680
    %v699 = vpack.c.b16 %v683, %v682
    %716 = vmatprep.subr.bf16.mxu0 0
    %717 = vmatpush1.bf16.msra.mxu0 %v684
    %718 = vmatprep.subr.bf16.mxu0 0
    %719 = vmatpush1.bf16.msra.mxu0 %v685
    %720 = vmatprep.subr.bf16.mxu0 0
    %721 = vmatpush1.bf16.msra.mxu0 %v686
    %722 = vmatprep.subr.bf16.mxu0 0
    %723 = vmatpush1.bf16.msra.mxu0 %v687
    %724 = vmatprep.subr.bf16.mxu0 0
    %725 = vmatpush1.bf16.msra.mxu0 %v688
    %726 = vmatprep.subr.bf16.mxu0 0
    %727 = vmatpush1.bf16.msra.mxu0 %v689
    %728 = vmatprep.subr.bf16.mxu0 0
    %729 = vmatpush1.bf16.msra.mxu0 %v690
    %730 = vmatprep.subr.bf16.mxu0 0
    %731 = vmatpush1.bf16.msra.mxu0 %v691
    %732 = vmatprep.subr.bf16.mxu0 0
    %733 = vmatpush1.bf16.msra.mxu0 %v692
    %734 = vmatprep.subr.bf16.mxu0 0
    %735 = vmatpush1.bf16.msra.mxu0 %v693
    %736 = vmatprep.subr.bf16.mxu0 0
    %737 = vmatpush1.bf16.msra.mxu0 %v694
    %738 = vmatprep.subr.bf16.mxu0 0
    %739 = vmatpush1.bf16.msra.mxu0 %v695
    %740 = vmatprep.subr.bf16.mxu0 0
    %741 = vmatpush1.bf16.msra.mxu0 %v696
    %742 = vmatprep.subr.bf16.mxu0 0
    %743 = vmatpush1.bf16.msra.mxu0 %v697
    %744 = vmatprep.subr.bf16.mxu0 0
    %745 = vmatpush1.bf16.msra.mxu0 %v698
    %746 = vmatprep.subr.bf16.mxu0 0
    %747 = vmatpush1.bf16.msra.mxu0 %v699
    %748 = vmatprep.mubr.bf16.mxu0 %v619
    %749 = vmatmul.mubr.bf16.gmra.mrb[0].mxu0 %v618
    %v750 = vpop.f32.mrb[0].mxu0
    %v751 = vadd.f32 %v617, %v750
    %v752 = vpop.f32.mrb[0].mxu0
    %v753 = vpop.f32.mrb[0].mxu0
    %v754 = vpop.f32.mrb[0].mxu0
    %755 = vdwg.mxu0
    %v756 = vmul.f32 %v751, 0.5
    %v757 = vtanh.pop %v756
    %v758 = vmul.f32 %v757, 0.5
    %v759 = vadd.f32 %v758, 0.5
    %760 = vst [vmem:[#allocation8] sm:$0xff] %v759
    // Predicated region
    $region26: #{tpu_custom_call.1} parent=1 // pred_check
      _
    $region27: #{tpu_custom_call.1} parent=1 // pred_check_branch
      %762 = sbr.rel (0) target = $region29
    $region28: #{tpu_custom_call.1} parent=1 // pred_region
      %s764 = ssub.s32 128, 128
      %765 = vsyncadd [#allocation4], %s764
      %s767 = sshll.u32 [#allocation8], 4
      %s768 = int_to_ptr.vmem [resolvable:$true] %s767
      %770 = dma.vmem_to_hbm [thread:$0]  %s768, 128, %s3, [#allocation4]
    $region29: #{tpu_custom_call.1} parent=1 // pred_fallthru
      _
    // Predicated region
    $region30: #{tpu_custom_call.1} parent=1 // pred_check
      _
    $region31: #{tpu_custom_call.1} parent=1 // pred_check_branch
      %772 = sbr.rel (0) target = $region33
    $region32: #{tpu_custom_call.1} parent=1 // pred_region
      %773 = dma.done [#allocation4], 128
    $region33: #{tpu_custom_call.1} parent=1 // pred_fallthru
      _
    %774 = vsyncpa [#allocation3], 1
    %775 = vsyncpa [#allocation6], 1
    %776 = vsyncpa [#allocation4], 1

</llo_original>
